<compile_context>
chip_gen: v7x
topology: tpu7x:2x2x1
jax: 0.10.0
libtpu: 0.0.40
codegen_flags: <defaults>
</compile_context>

<pallas_src>
import functools

import jax
import jax.numpy as jnp
from jax.experimental import pallas as pl
from jax.experimental.pallas import tpu as pltpu


def _round_up(x, m):
    return ((x + m - 1) // m) * m


def _make_actor_kernel(num_linear, act_limit):
    """Fused feature-major MLP kernel for `num_linear` Linear layers.

    Ref layout (all VMEM blocks):
      refs[0]        : obs tile [obs_dim, TB]   (f32, batch on lanes)
      refs[1 + 2*l]  : W_l      [d_{l+1}, d_l]  (f32, VMEM-resident)
      refs[2 + 2*l]  : b_l      [d_{l+1}, 1]    (f32, VMEM-resident)
      refs[-1]       : out tile [act_dim, TB]   (f32, lane-dense store)
    Hidden layers use ReLU, the final layer uses Tanh, then scale by act_limit.
    """

    def kernel(*refs):
        obs_ref = refs[0]
        out_ref = refs[-1]
        wb_refs = refs[1:-1]

        h = obs_ref[...]                                   # [d_0, TB] f32
        for layer in range(num_linear):
            w = wb_refs[2 * layer][...]                    # [d_out, d_in]
            b = wb_refs[2 * layer + 1][...]                # [d_out, 1]
            h = jnp.dot(w, h, preferred_element_type=jnp.float32) + b
            if layer < num_linear - 1:
                h = jnp.maximum(h, 0.0)                    # hidden activation: ReLU
            else:
                h = jnp.tanh(h)                            # output activation: Tanh
        out_ref[...] = (act_limit * h).astype(out_ref.dtype)

    return kernel


def _choose_batch_tile(B, tile_b):
    """Lane-axis (batch) tile: multiple of 128 (or the full batch), >=2 grid
    steps when the batch is large enough (v7x megacore)."""
    if B <= 256:
        return B                                   # single block, equals full dim
    half = _round_up(-(-B // 2), 128)              # ceil(B/2) rounded to lane multiple
    return min(tile_b, half)


@functools.partial(jax.jit, static_argnames=("act_limit", "tile_b"))
def actor_forward(obs, params, *, act_limit, tile_b=16384):
    """act_limit * Tanh(MLP(obs)) with ReLU hidden layers, fused in one kernel.

    obs: [B, obs_dim] f32.  params: (W0, b0, W1, b1, ...) with W_l stored
    [out, in] (PyTorch layout) and b_l [out, 1].
    """
    B, obs_dim = obs.shape
    ws = list(params[0::2])
    bs = list(params[1::2])
    num_linear = len(ws)
    act_dim = ws[-1].shape[0]

    # Feature-major: batch on the lane axis.  Wrapper-side transpose is layout
    # plumbing; everything inside the kernel and the output store is lane-dense.
    obs_t = obs.T                                          # [obs_dim, B]

    TB = _choose_batch_tile(B, tile_b)
    grid = (pl.cdiv(B, TB),)                               # partial final block OK

    in_specs = [pl.BlockSpec((obs_dim, TB), lambda i: (0, i))]
    args = [obs_t]
    for w, b in zip(ws, bs):
        in_specs.append(pl.BlockSpec(w.shape, lambda i: (0, 0)))   # VMEM-resident
        in_specs.append(pl.BlockSpec(b.shape, lambda i: (0, 0)))   # VMEM-resident
        args += [w, b]

    out_t = pl.pallas_call(
        _make_actor_kernel(num_linear, float(act_limit)),
        out_shape=jax.ShapeDtypeStruct((act_dim, B), jnp.float32),
        grid_spec=pltpu.PrefetchScalarGridSpec(
            num_scalar_prefetch=0,
            grid=grid,
            in_specs=in_specs,
            out_specs=pl.BlockSpec((act_dim, TB), lambda i: (0, i)),
        ),
        compiler_params=pltpu.CompilerParams(
            dimension_semantics=("parallel",),             # megacore sharding on v7x
            vmem_limit_bytes=32 * 1024 * 1024),            # safe on v5e/v6e/v7x
    )(*args)

    return out_t.T                                         # [B, act_dim]


def init_params(key, obs_dim, act_dim, hidden_layers):
    """PyTorch nn.Linear-style init; weight stored [out, in], bias [out, 1]."""
    sizes = [obs_dim] + list(hidden_layers) + [act_dim]
    params = []
    for i in range(len(sizes) - 1):
        key, kw, kb = jax.random.split(key, 3)
        bound = 1.0 / jnp.sqrt(sizes[i])
        w = jax.random.uniform(kw, (sizes[i + 1], sizes[i]), jnp.float32, -bound, bound)
        b = jax.random.uniform(kb, (sizes[i + 1], 1), jnp.float32, -bound, bound)
        params += [w, b]
    return tuple(params)


def actor_reference(obs, params, act_limit):
    """Pure-JAX f32 reference for correctness checking (batch-major)."""
    ws = params[0::2]
    bs = params[1::2]
    h = obs
    for i, (w, b) in enumerate(zip(ws, bs)):
        h = h @ w.T + b.T
        if i < len(ws) - 1:
            h = jnp.maximum(h, 0.0)
        else:
            h = jnp.tanh(h)
    return act_limit * h


if __name__ == "__main__":
    key = jax.random.PRNGKey(0)
    k_obs, k_par = jax.random.split(key)

    B, obs_dim, act_dim = 100, 24, 8      # ragged batch exercises partial-block path
    hidden_layers = (32, 32)              # two ReLU hidden layers
    act_limit = 2.0

    obs = jax.random.normal(k_obs, (B, obs_dim), jnp.float32)
    params = init_params(k_par, obs_dim, act_dim, hidden_layers)

    a = actor_forward(obs, params, act_limit=act_limit)
    a = jax.block_until_ready(a)

    a_ref = actor_reference(obs, params, act_limit)
    assert a.shape == (B, act_dim), a.shape
    # f32 end-to-end; tolerance covers possible MXU bf16-pass accumulation
    # differences vs. the XLA reference dot.
    max_err = float(jnp.max(jnp.abs(a - a_ref)))
    assert jnp.allclose(a, a_ref, atol=2e-2, rtol=2e-2), max_err

    print("KERNEL_OK")
</pallas_src>

<mosaic_0001>
module attributes {stable_mosaic.version = 11 : i64} {
  func.func @kernel(%arg0: i32, %arg1: memref<24x100xf32, #tpu.memory_space<vmem>>, %arg2: memref<32x24xf32, #tpu.memory_space<vmem>>, %arg3: memref<32x1xf32, #tpu.memory_space<vmem>>, %arg4: memref<32x32xf32, #tpu.memory_space<vmem>>, %arg5: memref<32x1xf32, #tpu.memory_space<vmem>>, %arg6: memref<8x32xf32, #tpu.memory_space<vmem>>, %arg7: memref<8x1xf32, #tpu.memory_space<vmem>>, %arg8: memref<8x100xf32, #tpu.memory_space<vmem>>) attributes {dimension_semantics = [#tpu.dimension_semantics<parallel>], iteration_bounds = array<i64: 1>, scalar_prefetch = 0 : i64, scratch_operands = 0 : i64, tpu.core_type = #tpu.core_type<tc>, window_params = [{transform_indices = @transform_0, window_bounds = array<i64: 24, 100>}, {pipeline_mode = #tpu.pipeline_mode<synchronous>, transform_indices = @transform_1, window_bounds = array<i64: 32, 24>}, {pipeline_mode = #tpu.pipeline_mode<synchronous>, transform_indices = @transform_2, window_bounds = array<i64: 32, 1>}, {pipeline_mode = #tpu.pipeline_mode<synchronous>, transform_indices = @transform_3, window_bounds = array<i64: 32, 32>}, {pipeline_mode = #tpu.pipeline_mode<synchronous>, transform_indices = @transform_4, window_bounds = array<i64: 32, 1>}, {pipeline_mode = #tpu.pipeline_mode<synchronous>, transform_indices = @transform_5, window_bounds = array<i64: 8, 32>}, {pipeline_mode = #tpu.pipeline_mode<synchronous>, transform_indices = @transform_6, window_bounds = array<i64: 8, 1>}, {transform_indices = @transform_7, window_bounds = array<i64: 8, 100>}]} {
    %c0 = arith.constant 0 : index
    %c0_0 = arith.constant 0 : index
    %0 = vector.load %arg1[%c0, %c0_0] : memref<24x100xf32, #tpu.memory_space<vmem>>, vector<24x100xf32>
    %c0_1 = arith.constant 0 : index
    %c0_2 = arith.constant 0 : index
    %1 = vector.load %arg2[%c0_1, %c0_2] : memref<32x24xf32, #tpu.memory_space<vmem>>, vector<32x24xf32>
    %c0_3 = arith.constant 0 : index
    %c0_4 = arith.constant 0 : index
    %2 = vector.load %arg3[%c0_3, %c0_4] : memref<32x1xf32, #tpu.memory_space<vmem>>, vector<32x1xf32>
    %cst = arith.constant dense<0.000000e+00> : vector<32x100xf32>
    %3 = tpu.matmul %1, %0, %cst {dimension_numbers = #tpu.dot_dimension_numbers<[1], [0], [0], [1], [0, 0, 1, 1], [], []>} : vector<32x24xf32>, vector<24x100xf32>, vector<32x100xf32> -> vector<32x100xf32>
    %4 = vector.broadcast %2 : vector<32x1xf32> to vector<32x100xf32>
    %5 = arith.addf %3, %4 : vector<32x100xf32>
    %cst_5 = arith.constant 0.000000e+00 : f32
    %6 = vector.broadcast %cst_5 : f32 to vector<32x100xf32>
    %7 = arith.maximumf %5, %6 : vector<32x100xf32>
    %c0_6 = arith.constant 0 : index
    %c0_7 = arith.constant 0 : index
    %8 = vector.load %arg4[%c0_6, %c0_7] : memref<32x32xf32, #tpu.memory_space<vmem>>, vector<32x32xf32>
    %c0_8 = arith.constant 0 : index
    %c0_9 = arith.constant 0 : index
    %9 = vector.load %arg5[%c0_8, %c0_9] : memref<32x1xf32, #tpu.memory_space<vmem>>, vector<32x1xf32>
    %cst_10 = arith.constant dense<0.000000e+00> : vector<32x100xf32>
    %10 = tpu.matmul %8, %7, %cst_10 {dimension_numbers = #tpu.dot_dimension_numbers<[1], [0], [0], [1], [0, 0, 1, 1], [], []>} : vector<32x32xf32>, vector<32x100xf32>, vector<32x100xf32> -> vector<32x100xf32>
    %11 = vector.broadcast %9 : vector<32x1xf32> to vector<32x100xf32>
    %12 = arith.addf %10, %11 : vector<32x100xf32>
    %cst_11 = arith.constant 0.000000e+00 : f32
    %13 = vector.broadcast %cst_11 : f32 to vector<32x100xf32>
    %14 = arith.maximumf %12, %13 : vector<32x100xf32>
    %c0_12 = arith.constant 0 : index
    %c0_13 = arith.constant 0 : index
    %15 = vector.load %arg6[%c0_12, %c0_13] : memref<8x32xf32, #tpu.memory_space<vmem>>, vector<8x32xf32>
    %c0_14 = arith.constant 0 : index
    %c0_15 = arith.constant 0 : index
    %16 = vector.load %arg7[%c0_14, %c0_15] : memref<8x1xf32, #tpu.memory_space<vmem>>, vector<8x1xf32>
    %cst_16 = arith.constant dense<0.000000e+00> : vector<8x100xf32>
    %17 = tpu.matmul %15, %14, %cst_16 {dimension_numbers = #tpu.dot_dimension_numbers<[1], [0], [0], [1], [0, 0, 1, 1], [], []>} : vector<8x32xf32>, vector<32x100xf32>, vector<8x100xf32> -> vector<8x100xf32>
    %18 = vector.broadcast %16 : vector<8x1xf32> to vector<8x100xf32>
    %19 = arith.addf %17, %18 : vector<8x100xf32>
    %20 = math.tanh %19 : vector<8x100xf32>
    %cst_17 = arith.constant 2.000000e+00 : f32
    %21 = vector.broadcast %cst_17 : f32 to vector<8x100xf32>
    %22 = arith.mulf %21, %20 : vector<8x100xf32>
    %c0_18 = arith.constant 0 : index
    %c0_19 = arith.constant 0 : index
    %23 = vector.load %arg8[%c0_18, %c0_19] : memref<8x100xf32, #tpu.memory_space<vmem>>, vector<8x100xf32>
    tpu.vector_store %arg8[%c0_18, %c0_19], %22 {strides = array<i32>} : memref<8x100xf32, #tpu.memory_space<vmem>>, vector<8x100xf32>,
    return
  }
  func.func @transform_0(%arg0: i32) -> (i32, i32) {
    %c0_i32 = arith.constant 0 : i32
    %c0_i32_0 = arith.constant 0 : i32
    return %c0_i32, %arg0 : i32, i32
  }
  func.func @transform_1(%arg0: i32) -> (i32, i32) {
    %c0_i32 = arith.constant 0 : i32
    %c0_i32_0 = arith.constant 0 : i32
    %c0_i32_1 = arith.constant 0 : i32
    return %c0_i32, %c0_i32_0 : i32, i32
  }
  func.func @transform_2(%arg0: i32) -> (i32, i32) {
    %c0_i32 = arith.constant 0 : i32
    %c0_i32_0 = arith.constant 0 : i32
    %c0_i32_1 = arith.constant 0 : i32
    return %c0_i32, %c0_i32_0 : i32, i32
  }
  func.func @transform_3(%arg0: i32) -> (i32, i32) {
    %c0_i32 = arith.constant 0 : i32
    %c0_i32_0 = arith.constant 0 : i32
    %c0_i32_1 = arith.constant 0 : i32
    return %c0_i32, %c0_i32_0 : i32, i32
  }
  func.func @transform_4(%arg0: i32) -> (i32, i32) {
    %c0_i32 = arith.constant 0 : i32
    %c0_i32_0 = arith.constant 0 : i32
    %c0_i32_1 = arith.constant 0 : i32
    return %c0_i32, %c0_i32_0 : i32, i32
  }
  func.func @transform_5(%arg0: i32) -> (i32, i32) {
    %c0_i32 = arith.constant 0 : i32
    %c0_i32_0 = arith.constant 0 : i32
    %c0_i32_1 = arith.constant 0 : i32
    return %c0_i32, %c0_i32_0 : i32, i32
  }
  func.func @transform_6(%arg0: i32) -> (i32, i32) {
    %c0_i32 = arith.constant 0 : i32
    %c0_i32_0 = arith.constant 0 : i32
    %c0_i32_1 = arith.constant 0 : i32
    return %c0_i32, %c0_i32_0 : i32, i32
  }
  func.func @transform_7(%arg0: i32) -> (i32, i32) {
    %c0_i32 = arith.constant 0 : i32
    %c0_i32_0 = arith.constant 0 : i32
    return %c0_i32, %arg0 : i32, i32
  }
}

</mosaic_0001>

<llo_original>
// kernel: actor_forward.1
$region0: #{actor_forward.1}
  #allocation0 [shape = 'u32[]', space=smem, size = 0x4, offset = 0x4, fixed_abs, tag = 'smem constant byte address 0x4 - core index']
  #allocation1 [shape = 'u32[144,128]{1,0:T(1,128)}', space=vmem, size = 0x12000, scoped, tag = 'internal scratch']
  %s0 = inlined_call_operand.vmem [shape: f32[24,100], index: 0, kind: input, shape index: {}]
  %s1 = inlined_call_operand.vmem [shape: f32[32,24], index: 1, kind: input, shape index: {}]
  %s2 = inlined_call_operand.vmem [shape: f32[32,1], index: 2, kind: input, shape index: {}]
  %s3 = inlined_call_operand.vmem [shape: f32[32,32], index: 3, kind: input, shape index: {}]
  %s4 = inlined_call_operand.vmem [shape: f32[32,1], index: 4, kind: input, shape index: {}]
  %s5 = inlined_call_operand.vmem [shape: f32[8,32], index: 5, kind: input, shape index: {}]
  %s6 = inlined_call_operand.vmem [shape: f32[8,1], index: 6, kind: input, shape index: {}]
  %s7 = inlined_call_operand.hbm [shape: f32[8,100], index: 7, kind: output, shape index: {}]
  %s8 = sld [smem:[#allocation0]]
  $region38: #{actor_forward.1} parent=0
    _
  %s10 = ssub.s32 1, %s8
  %s11 = scalar_select 0, %s10, %s8
  $region1: #{actor_forward.1} parent=0
    #allocation2 [shape = 'u8[4096]{0}', space=vmem, size = 0x1000, scoped, tag = 'output window, operand 0, single buffered']
    #allocation3 [shape = 's32[1]{0}', space=sflag, size = 0x4, scoped, tag = 'scoped memory for actor_forward.1']
    %12 = vsyncpa [#allocation3], 0
    // Predicated region
    $region2: #{actor_forward.1} parent=1 // pred_check
      _
    $region3: #{actor_forward.1} parent=1 // pred_check_branch
      %14 = sbr.rel (0) target = $region5
    $region4: #{actor_forward.1} parent=1 // pred_region
      _
    $region5: #{actor_forward.1} parent=1 // pred_fallthru
      _
    // Predicated region
    $region6: #{actor_forward.1} parent=1 // pred_check
      _
    $region7: #{actor_forward.1} parent=1 // pred_check_branch
      %16 = sbr.rel (0) target = $region9
    $region8: #{actor_forward.1} parent=1 // pred_region
      _
    $region9: #{actor_forward.1} parent=1 // pred_fallthru
      _
    // Predicated region
    $region10: #{actor_forward.1} parent=1 // pred_check
      _
    $region11: #{actor_forward.1} parent=1 // pred_check_branch
      %18 = sbr.rel (0) target = $region13
    $region12: #{actor_forward.1} parent=1 // pred_region
      _
    $region13: #{actor_forward.1} parent=1 // pred_fallthru
      _
    // Predicated region
    $region14: #{actor_forward.1} parent=1 // pred_check
      _
    $region15: #{actor_forward.1} parent=1 // pred_check_branch
      %20 = sbr.rel (0) target = $region17
    $region16: #{actor_forward.1} parent=1 // pred_region
      _
    $region17: #{actor_forward.1} parent=1 // pred_fallthru
      _
    // Predicated region
    $region18: #{actor_forward.1} parent=1 // pred_check
      _
    $region19: #{actor_forward.1} parent=1 // pred_check_branch
      %22 = sbr.rel (0) target = $region21
    $region20: #{actor_forward.1} parent=1 // pred_region
      _
    $region21: #{actor_forward.1} parent=1 // pred_fallthru
      _
    // Predicated region
    $region22: #{actor_forward.1} parent=1 // pred_check
      _
    $region23: #{actor_forward.1} parent=1 // pred_check_branch
      %24 = sbr.rel (0) target = $region25
    $region24: #{actor_forward.1} parent=1 // pred_region
      _
    $region25: #{actor_forward.1} parent=1 // pred_fallthru
      _
    // Predicated region
    $region26: #{actor_forward.1} parent=1 // pred_check
      _
    $region27: #{actor_forward.1} parent=1 // pred_check_branch
      %26 = sbr.rel (0) target = $region29
    $region28: #{actor_forward.1} parent=1 // pred_region
      _
    $region29: #{actor_forward.1} parent=1 // pred_fallthru
      _
    %v27 = vld [vmem:[%s0] sm:$0xff]
    %v28 = vld [vmem:[%s0 + $0x8] sm:$0xff]
    %v29 = vld [vmem:[%s0 + $0x10] sm:$0xff]
    %v30 = vld [vmem:[%s1] sm:$0xff]
    %v31 = vld [vmem:[%s1 + $0x8] sm:$0xff]
    %v32 = vld [vmem:[%s1 + $0x10] sm:$0xff]
    %v33 = vld [vmem:[%s1 + $0x18] sm:$0xff]
    %v34 = vld [vmem:[%s2] sm:$0xff]
    %v35 = vld [vmem:[%s2 + $0x8] sm:$0xff]
    %v36 = vld [vmem:[%s2 + $0x10] sm:$0xff]
    %v37 = vld [vmem:[%s2 + $0x18] sm:$0xff]
    %39 = vset.pattern.permute.xlu0 0
    %40 = vperm.xlu0 %39, %v34
    %v41 = vpop.permute.xlu0 %40
    %44 = vset.pattern.permute.xlu0 0
    %45 = vperm.xlu0 %44, %v35
    %v46 = vpop.permute.xlu0 %45
    %49 = vset.pattern.permute.xlu0 0
    %50 = vperm.xlu0 %49, %v36
    %v51 = vpop.permute.xlu0 %50
    %54 = vset.pattern.permute.xlu0 0
    %55 = vperm.xlu0 %54, %v37
    %v56 = vpop.permute.xlu0 %55
    %vm58 = vcmask 195584
    %v60 = vsel %vm58, %v30, 0
    %v63 = vsel %vm58, %v31, 0
    %v66 = vsel %vm58, %v32, 0
    %v69 = vsel %vm58, %v33, 0
    %71 = vmatprep.subr.mxu0 0.0
    %72 = vmatpush1.msra.mxu0 %v27
    %73 = vmatprep.subr.mxu0 0.0
    %74 = vmatpush1.msra.mxu0 %v28
    %75 = vmatprep.subr.mxu0 0.0
    %76 = vmatpush1.msra.mxu0 %v29
    %77 = vmatprep.subr.mxu0 0.0
    %78 = vmatpush1.msra.mxu0 0.0
    %79 = vmatprep.subr.mxu0 0.0
    %80 = vmatpush1.msra.mxu0 0.0
    %81 = vmatprep.subr.mxu0 0.0
    %82 = vmatpush1.msra.mxu0 0.0
    %83 = vmatprep.subr.mxu0 0.0
    %84 = vmatpush1.msra.mxu0 0.0
    %85 = vmatprep.subr.mxu0 0.0
    %86 = vmatpush1.msra.mxu0 0.0
    %87 = vmatprep.subr.mxu0 0.0
    %88 = vmatpush1.msra.mxu0 0.0
    %89 = vmatprep.subr.mxu0 0.0
    %90 = vmatpush1.msra.mxu0 0.0
    %91 = vmatprep.subr.mxu0 0.0
    %92 = vmatpush1.msra.mxu0 0.0
    %93 = vmatprep.subr.mxu0 0.0
    %94 = vmatpush1.msra.mxu0 0.0
    %95 = vmatprep.subr.mxu0 0.0
    %96 = vmatpush1.msra.mxu0 0.0
    %97 = vmatprep.subr.mxu0 0.0
    %98 = vmatpush1.msra.mxu0 0.0
    %99 = vmatprep.subr.mxu0 0.0
    %100 = vmatpush1.msra.mxu0 0.0
    %101 = vmatprep.subr.mxu0 0.0
    %102 = vmatpush1.msra.mxu0 0.0
    %103 = vmatprep.subr.mxu0 0.0
    %104 = vmatpush1.msra.mxu0 0.0
    %105 = vmatprep.subr.mxu0 0.0
    %106 = vmatpush1.msra.mxu0 0.0
    %107 = vmatprep.subr.mxu0 0.0
    %108 = vmatpush1.msra.mxu0 0.0
    %109 = vmatprep.subr.mxu0 0.0
    %110 = vmatpush1.msra.mxu0 0.0
    %111 = vmatprep.subr.mxu0 0.0
    %112 = vmatpush1.msra.mxu0 0.0
    %113 = vmatprep.subr.mxu0 0.0
    %114 = vmatpush1.msra.mxu0 0.0
    %115 = vmatprep.subr.mxu0 0.0
    %116 = vmatpush1.msra.mxu0 0.0
    %117 = vmatprep.subr.mxu0 0.0
    %118 = vmatpush1.msra.mxu0 0.0
    %119 = vmatprep.subr.mxu0 0.0
    %120 = vmatpush1.msra.mxu0 0.0
    %121 = vmatprep.subr.mxu0 0.0
    %122 = vmatpush1.msra.mxu0 0.0
    %123 = vmatprep.subr.mxu0 0.0
    %124 = vmatpush1.msra.mxu0 0.0
    %125 = vmatprep.subr.mxu0 0.0
    %126 = vmatpush1.msra.mxu0 0.0
    %127 = vmatprep.subr.mxu0 0.0
    %128 = vmatpush1.msra.mxu0 0.0
    %129 = vmatprep.subr.mxu0 0.0
    %130 = vmatpush1.msra.mxu0 0.0
    %131 = vmatprep.subr.mxu0 0.0
    %132 = vmatpush1.msra.mxu0 0.0
    %133 = vmatprep.subr.mxu0 0.0
    %134 = vmatpush1.msra.mxu0 0.0
    %135 = vmatprep.mubr.f32.mxu0 0.0
    %136 = vmatmul.mubr.f32.gmra.mrb[0].mxu0 %v60
    %v137 = vpop.f32.mrb[0].mxu0
    %v138 = vadd.f32 %v41, %v137
    %v139 = vpop.f32.mrb[0].mxu0
    %140 = vmatprep.mubr.f32.mxu0 0.0
    %141 = vmatmul.mubr.f32.gmra.mrb[0].mxu0 %v63
    %v142 = vpop.f32.mrb[0].mxu0
    %v143 = vadd.f32 %v46, %v142
    %v144 = vpop.f32.mrb[0].mxu0
    %145 = vmatprep.mubr.f32.mxu0 0.0
    %146 = vmatmul.mubr.f32.gmra.mrb[0].mxu0 %v66
    %v147 = vpop.f32.mrb[0].mxu0
    %v148 = vadd.f32 %v51, %v147
    %v149 = vpop.f32.mrb[0].mxu0
    %150 = vmatprep.mubr.f32.mxu0 0.0
    %151 = vmatmul.mubr.f32.gmra.mrb[0].mxu0 %v69
    %v152 = vpop.f32.mrb[0].mxu0
    %v153 = vadd.f32 %v56, %v152
    %v154 = vpop.f32.mrb[0].mxu0
    %155 = vdwg.mxu0
    %v156 = vmax.f32 %v138, 0.0
    %v157 = vmax.f32 %v143, 0.0
    %v158 = vmax.f32 %v148, 0.0
    %v159 = vmax.f32 %v153, 0.0
    %v160 = vld [vmem:[%s3] sm:$0xff]
    %v161 = vld [vmem:[%s3 + $0x8] sm:$0xff]
    %v162 = vld [vmem:[%s3 + $0x10] sm:$0xff]
    %v163 = vld [vmem:[%s3 + $0x18] sm:$0xff]
    %v164 = vld [vmem:[%s4] sm:$0xff]
    %v165 = vld [vmem:[%s4 + $0x8] sm:$0xff]
    %v166 = vld [vmem:[%s4 + $0x10] sm:$0xff]
    %v167 = vld [vmem:[%s4 + $0x18] sm:$0xff]
    %169 = vset.pattern.permute.xlu0 0
    %170 = vperm.xlu0 %169, %v164
    %v171 = vpop.permute.xlu0 %170
    %174 = vset.pattern.permute.xlu0 0
    %175 = vperm.xlu0 %174, %v165
    %v176 = vpop.permute.xlu0 %175
    %179 = vset.pattern.permute.xlu0 0
    %180 = vperm.xlu0 %179, %v166
    %v181 = vpop.permute.xlu0 %180
    %184 = vset.pattern.permute.xlu0 0
    %185 = vperm.xlu0 %184, %v167
    %v186 = vpop.permute.xlu0 %185
    %vm188 = vcmask 261120
    %v190 = vsel %vm188, %v160, 0
    %v193 = vsel %vm188, %v161, 0
    %v196 = vsel %vm188, %v162, 0
    %v199 = vsel %vm188, %v163, 0
    %201 = vmatprep.subr.mxu0 0.0
    %202 = vmatpush1.msra.mxu0 %v156
    %203 = vmatprep.subr.mxu0 0.0
    %204 = vmatpush1.msra.mxu0 %v157
    %205 = vmatprep.subr.mxu0 0.0
    %206 = vmatpush1.msra.mxu0 %v158
    %207 = vmatprep.subr.mxu0 0.0
    %208 = vmatpush1.msra.mxu0 %v159
    %209 = vmatprep.subr.mxu0 0.0
    %210 = vmatpush1.msra.mxu0 0.0
    %211 = vmatprep.subr.mxu0 0.0
    %212 = vmatpush1.msra.mxu0 0.0
    %213 = vmatprep.subr.mxu0 0.0
    %214 = vmatpush1.msra.mxu0 0.0
    %215 = vmatprep.subr.mxu0 0.0
    %216 = vmatpush1.msra.mxu0 0.0
    %217 = vmatprep.subr.mxu0 0.0
    %218 = vmatpush1.msra.mxu0 0.0
    %219 = vmatprep.subr.mxu0 0.0
    %220 = vmatpush1.msra.mxu0 0.0
    %221 = vmatprep.subr.mxu0 0.0
    %222 = vmatpush1.msra.mxu0 0.0
    %223 = vmatprep.subr.mxu0 0.0
    %224 = vmatpush1.msra.mxu0 0.0
    %225 = vmatprep.subr.mxu0 0.0
    %226 = vmatpush1.msra.mxu0 0.0
    %227 = vmatprep.subr.mxu0 0.0
    %228 = vmatpush1.msra.mxu0 0.0
    %229 = vmatprep.subr.mxu0 0.0
    %230 = vmatpush1.msra.mxu0 0.0
    %231 = vmatprep.subr.mxu0 0.0
    %232 = vmatpush1.msra.mxu0 0.0
    %233 = vmatprep.subr.mxu0 0.0
    %234 = vmatpush1.msra.mxu0 0.0
    %235 = vmatprep.subr.mxu0 0.0
    %236 = vmatpush1.msra.mxu0 0.0
    %237 = vmatprep.subr.mxu0 0.0
    %238 = vmatpush1.msra.mxu0 0.0
    %239 = vmatprep.subr.mxu0 0.0
    %240 = vmatpush1.msra.mxu0 0.0
    %241 = vmatprep.subr.mxu0 0.0
    %242 = vmatpush1.msra.mxu0 0.0
    %243 = vmatprep.subr.mxu0 0.0
    %244 = vmatpush1.msra.mxu0 0.0
    %245 = vmatprep.subr.mxu0 0.0
    %246 = vmatpush1.msra.mxu0 0.0
    %247 = vmatprep.subr.mxu0 0.0
    %248 = vmatpush1.msra.mxu0 0.0
    %249 = vmatprep.subr.mxu0 0.0
    %250 = vmatpush1.msra.mxu0 0.0
    %251 = vmatprep.subr.mxu0 0.0
    %252 = vmatpush1.msra.mxu0 0.0
    %253 = vmatprep.subr.mxu0 0.0
    %254 = vmatpush1.msra.mxu0 0.0
    %255 = vmatprep.subr.mxu0 0.0
    %256 = vmatpush1.msra.mxu0 0.0
    %257 = vmatprep.subr.mxu0 0.0
    %258 = vmatpush1.msra.mxu0 0.0
    %259 = vmatprep.subr.mxu0 0.0
    %260 = vmatpush1.msra.mxu0 0.0
    %261 = vmatprep.subr.mxu0 0.0
    %262 = vmatpush1.msra.mxu0 0.0
    %263 = vmatprep.subr.mxu0 0.0
    %264 = vmatpush1.msra.mxu0 0.0
    %265 = vmatprep.mubr.f32.mxu0 0.0
    %266 = vmatmul.mubr.f32.gmra.mrb[0].mxu0 %v190
    %v267 = vpop.f32.mrb[0].mxu0
    %v268 = vadd.f32 %v171, %v267
    %v269 = vpop.f32.mrb[0].mxu0
    %270 = vmatprep.mubr.f32.mxu0 0.0
    %271 = vmatmul.mubr.f32.gmra.mrb[0].mxu0 %v193
    %v272 = vpop.f32.mrb[0].mxu0
    %v273 = vadd.f32 %v176, %v272
    %v274 = vpop.f32.mrb[0].mxu0
    %275 = vmatprep.mubr.f32.mxu0 0.0
    %276 = vmatmul.mubr.f32.gmra.mrb[0].mxu0 %v196
    %v277 = vpop.f32.mrb[0].mxu0
    %v278 = vadd.f32 %v181, %v277
    %v279 = vpop.f32.mrb[0].mxu0
    %280 = vmatprep.mubr.f32.mxu0 0.0
    %281 = vmatmul.mubr.f32.gmra.mrb[0].mxu0 %v199
    %v282 = vpop.f32.mrb[0].mxu0
    %v283 = vadd.f32 %v186, %v282
    %v284 = vpop.f32.mrb[0].mxu0
    %285 = vdwg.mxu0
    %v286 = vmax.f32 %v268, 0.0
    %v287 = vmax.f32 %v273, 0.0
    %v288 = vmax.f32 %v278, 0.0
    %v289 = vmax.f32 %v283, 0.0
    %v290 = vld [vmem:[%s5] sm:$0xff]
    %v291 = vld [vmem:[%s6] sm:$0xff]
    %293 = vset.pattern.permute.xlu0 0
    %294 = vperm.xlu0 %293, %v291
    %v295 = vpop.permute.xlu0 %294
    %v298 = vsel %vm188, %v290, 0
    %300 = vmatprep.subr.mxu0 0.0
    %301 = vmatpush1.msra.mxu0 %v286
    %302 = vmatprep.subr.mxu0 0.0
    %303 = vmatpush1.msra.mxu0 %v287
    %304 = vmatprep.subr.mxu0 0.0
    %305 = vmatpush1.msra.mxu0 %v288
    %306 = vmatprep.subr.mxu0 0.0
    %307 = vmatpush1.msra.mxu0 %v289
    %308 = vmatprep.subr.mxu0 0.0
    %309 = vmatpush1.msra.mxu0 0.0
    %310 = vmatprep.subr.mxu0 0.0
    %311 = vmatpush1.msra.mxu0 0.0
    %312 = vmatprep.subr.mxu0 0.0
    %313 = vmatpush1.msra.mxu0 0.0
    %314 = vmatprep.subr.mxu0 0.0
    %315 = vmatpush1.msra.mxu0 0.0
    %316 = vmatprep.subr.mxu0 0.0
    %317 = vmatpush1.msra.mxu0 0.0
    %318 = vmatprep.subr.mxu0 0.0
    %319 = vmatpush1.msra.mxu0 0.0
    %320 = vmatprep.subr.mxu0 0.0
    %321 = vmatpush1.msra.mxu0 0.0
    %322 = vmatprep.subr.mxu0 0.0
    %323 = vmatpush1.msra.mxu0 0.0
    %324 = vmatprep.subr.mxu0 0.0
    %325 = vmatpush1.msra.mxu0 0.0
    %326 = vmatprep.subr.mxu0 0.0
    %327 = vmatpush1.msra.mxu0 0.0
    %328 = vmatprep.subr.mxu0 0.0
    %329 = vmatpush1.msra.mxu0 0.0
    %330 = vmatprep.subr.mxu0 0.0
    %331 = vmatpush1.msra.mxu0 0.0
    %332 = vmatprep.subr.mxu0 0.0
    %333 = vmatpush1.msra.mxu0 0.0
    %334 = vmatprep.subr.mxu0 0.0
    %335 = vmatpush1.msra.mxu0 0.0
    %336 = vmatprep.subr.mxu0 0.0
    %337 = vmatpush1.msra.mxu0 0.0
    %338 = vmatprep.subr.mxu0 0.0
    %339 = vmatpush1.msra.mxu0 0.0
    %340 = vmatprep.subr.mxu0 0.0
    %341 = vmatpush1.msra.mxu0 0.0
    %342 = vmatprep.subr.mxu0 0.0
    %343 = vmatpush1.msra.mxu0 0.0
    %344 = vmatprep.subr.mxu0 0.0
    %345 = vmatpush1.msra.mxu0 0.0
    %346 = vmatprep.subr.mxu0 0.0
    %347 = vmatpush1.msra.mxu0 0.0
    %348 = vmatprep.subr.mxu0 0.0
    %349 = vmatpush1.msra.mxu0 0.0
    %350 = vmatprep.subr.mxu0 0.0
    %351 = vmatpush1.msra.mxu0 0.0
    %352 = vmatprep.subr.mxu0 0.0
    %353 = vmatpush1.msra.mxu0 0.0
    %354 = vmatprep.subr.mxu0 0.0
    %355 = vmatpush1.msra.mxu0 0.0
    %356 = vmatprep.subr.mxu0 0.0
    %357 = vmatpush1.msra.mxu0 0.0
    %358 = vmatprep.subr.mxu0 0.0
    %359 = vmatpush1.msra.mxu0 0.0
    %360 = vmatprep.subr.mxu0 0.0
    %361 = vmatpush1.msra.mxu0 0.0
    %362 = vmatprep.subr.mxu0 0.0
    %363 = vmatpush1.msra.mxu0 0.0
    %364 = vmatprep.mubr.f32.mxu0 0.0
    %365 = vmatmul.mubr.f32.gmra.mrb[0].mxu0 %v298
    %v366 = vpop.f32.mrb[0].mxu0
    %v367 = vadd.f32 %v295, %v366
    %v368 = vpop.f32.mrb[0].mxu0
    %369 = vdwg.mxu0
    %v370 = vtanh.pop %v367
    %v371 = vmul.f32 %v370, 2.0
    %vm372 = vcmask 818176
    %373 = vst.msk [vmem:[#allocation2] sm:$0xff] %vm372, %v371
    // Predicated region
    $region30: #{actor_forward.1} parent=1 // pred_check
      _
    $region31: #{actor_forward.1} parent=1 // pred_check_branch
      %375 = sbr.rel (0) target = $region33
    $region32: #{actor_forward.1} parent=1 // pred_region
      %s377 = ssub.s32 128, 128
      %378 = vsyncadd [#allocation3], %s377
      %s380 = sshll.u32 [#allocation2], 4
      %s381 = int_to_ptr.vmem [resolvable:$true] %s380
      %383 = dma.vmem_to_hbm [thread:$0]  %s381, 128, %s7, [#allocation3]
    $region33: #{actor_forward.1} parent=1 // pred_fallthru
      _
    // Predicated region
    $region34: #{actor_forward.1} parent=1 // pred_check
      _
    $region35: #{actor_forward.1} parent=1 // pred_check_branch
      %385 = sbr.rel (0) target = $region37
    $region36: #{actor_forward.1} parent=1 // pred_region
      %386 = dma.done [#allocation3], 128
    $region37: #{actor_forward.1} parent=1 // pred_fallthru
      _
    %387 = vsyncpa [#allocation3], 1

</llo_original>
